<compile_context>
chip_gen: v7x
topology: tpu7x:2x2x1
jax: 0.10.0
libtpu: 0.0.40
codegen_flags: <defaults>
</compile_context>

<pallas_src>
import jax
import jax.numpy as jnp
from jax.experimental import pallas as pl
from jax.experimental.pallas import tpu as pltpu


def _round_up(x, m):
    return (x + m - 1) // m * m


def _mlp_kernel(xt_ref, w1_ref, b1_ref, w2_ref, b2_ref, ot_ref):
    """One batch tile: xt (obs_dim, TB) -> ot (n_acts, TB), feature-major."""
    # Hidden layer: (H, obs_dim) @ (obs_dim, TB) -> (H, TB); f32 accumulation on MXU.
    h = jnp.dot(w1_ref[...], xt_ref[...], preferred_element_type=jnp.float32)
    h = jnp.tanh(h + b1_ref[...])                    # bias add + tanh in f32 (EUP)
    # Output layer: (n_acts, H) @ (H, TB) -> (n_acts, TB); Identity() is a no-op.
    h = h.astype(w2_ref.dtype)                       # bf16 MXU feed when enabled
    out = jnp.dot(w2_ref[...], h, preferred_element_type=jnp.float32) + b2_ref[...]
    ot_ref[...] = out.astype(ot_ref.dtype)           # lane-dense store


def net_forward(x, w1, b1, w2, b2, *, compute_dtype=None, block_batch=None):
    """Pallas forward of Net.

    x: (batch, obs_dim); w1: (H, obs_dim); b1: (H,); w2: (n_acts, H); b2: (n_acts,)
    (PyTorch nn.Linear weight/bias layout). Returns (batch, n_acts) logits.
    """
    batch, obs_dim = x.shape
    hidden = w1.shape[0]
    n_acts = w2.shape[0]
    out_dtype = x.dtype
    cdt = x.dtype if compute_dtype is None else compute_dtype

    # Batch tile: large to amortize ~0.35us/grid-step, multiple of 128 (lane axis).
    if block_batch is None:
        block_batch = min(4096, _round_up(batch, 128))
    tb = _round_up(block_batch, 128)
    b_pad = _round_up(batch, tb)
    grid = (b_pad // tb,)

    # Feature-major (transposed) input, zero-padded along batch.
    xt = jnp.zeros((obs_dim, b_pad), cdt).at[:, :batch].set(x.astype(cdt).T)
    w1c = w1.astype(cdt)
    w2c = w2.astype(cdt)
    b1c = b1.astype(jnp.float32).reshape(hidden, 1)   # bias adds stay in f32
    b2c = b2.astype(jnp.float32).reshape(n_acts, 1)

    itemsize = jnp.dtype(cdt).itemsize
    cost = pl.CostEstimate(
        flops=2 * b_pad * (obs_dim * hidden + hidden * n_acts),
        transcendentals=b_pad * hidden,
        bytes_accessed=(
            xt.size * itemsize
            + b_pad * n_acts * jnp.dtype(out_dtype).itemsize
            + (w1c.size + w2c.size) * itemsize
            + (b1c.size + b2c.size) * 4
        ),
    )

    def resident(shape):  # full-array, VMEM-resident across all grid steps
        return pl.BlockSpec(shape, lambda i: (0, 0))

    out_t = pl.pallas_call(
        _mlp_kernel,
        out_shape=jax.ShapeDtypeStruct((n_acts, b_pad), out_dtype),
        grid_spec=pltpu.PrefetchScalarGridSpec(
            num_scalar_prefetch=0,
            grid=grid,
            in_specs=[
                pl.BlockSpec((obs_dim, tb), lambda i: (0, i)),  # streamed batch tile
                resident((hidden, obs_dim)),
                resident((hidden, 1)),
                resident((n_acts, hidden)),
                resident((n_acts, 1)),
            ],
            out_specs=pl.BlockSpec((n_acts, tb), lambda i: (0, i)),  # lane-dense out
        ),
        compiler_params=pltpu.CompilerParams(dimension_semantics=("parallel",)),
        cost_estimate=cost,
    )(xt, w1c, b1c, w2c, b2c)

    # Back to the PyTorch (batch, n_acts) layout; drop batch padding.
    return out_t.T[:batch]


def init_params(key, obs_dim, hidden_size, n_acts, dtype=jnp.float32):
    """nn.Linear-style U(-1/sqrt(fan_in), 1/sqrt(fan_in)) init, PyTorch weight layout."""
    k1, k2, k3, k4 = jax.random.split(key, 4)
    bound1 = 1.0 / (obs_dim ** 0.5)
    bound2 = 1.0 / (hidden_size ** 0.5)
    w1 = jax.random.uniform(k1, (hidden_size, obs_dim), dtype, -bound1, bound1)
    b1 = jax.random.uniform(k2, (hidden_size,), dtype, -bound1, bound1)
    w2 = jax.random.uniform(k3, (n_acts, hidden_size), dtype, -bound2, bound2)
    b2 = jax.random.uniform(k4, (n_acts,), dtype, -bound2, bound2)
    return w1, b1, w2, b2


if __name__ == "__main__":
    obs_dim, hidden_size, n_acts, batch = 4, 32, 2, 2

    key = jax.random.PRNGKey(0)
    kx, kp = jax.random.split(key)
    x = jax.random.normal(kx, (batch, obs_dim), jnp.float32)
    w1, b1, w2, b2 = init_params(kp, obs_dim, hidden_size, n_acts)

    def ref_fn(xv):
        return jnp.tanh(xv @ w1.T + b1) @ w2.T + b2

    # f32 path (single grid step, matches PyTorch math).
    logits = net_forward(x, w1, b1, w2, b2)
    jax.block_until_ready(logits)
    assert logits.shape == (batch, n_acts)
    assert jnp.allclose(logits, ref_fn(x), atol=1e-5, rtol=1e-5)

    # Tiled path: batch not a tile multiple, grid > 1 (exercises padding + pipeline).
    xb = jax.random.normal(kx, (272, obs_dim), jnp.float32)
    logits_b = net_forward(xb, w1, b1, w2, b2, block_batch=128)
    jax.block_until_ready(logits_b)
    assert logits_b.shape == (272, n_acts)
    assert jnp.allclose(logits_b, ref_fn(xb), atol=1e-5, rtol=1e-5)

    # bf16 MXU/HBM path (v6e/v7x); accumulation, bias add and tanh stay in f32.
    logits_bf = net_forward(xb, w1, b1, w2, b2, compute_dtype=jnp.bfloat16,
                            block_batch=128)
    jax.block_until_ready(logits_bf)
    assert jnp.allclose(logits_bf, ref_fn(xb), atol=5e-2, rtol=5e-2)

    print("KERNEL_OK")
</pallas_src>

<mosaic_0001>
module attributes {stable_mosaic.version = 11 : i64} {
  func.func @_mlp_kernel(%arg0: i32, %arg1: memref<4x128xf32, #tpu.memory_space<vmem>>, %arg2: memref<32x4xf32, #tpu.memory_space<vmem>>, %arg3: memref<32x1xf32, #tpu.memory_space<vmem>>, %arg4: memref<2x32xf32, #tpu.memory_space<vmem>>, %arg5: memref<2x1xf32, #tpu.memory_space<vmem>>, %arg6: memref<2x128xf32, #tpu.memory_space<vmem>>) attributes {dimension_semantics = [#tpu.dimension_semantics<parallel>], iteration_bounds = array<i64: 1>, scalar_prefetch = 0 : i64, scratch_operands = 0 : i64, tpu.core_type = #tpu.core_type<tc>, window_params = [{transform_indices = @transform_0, window_bounds = array<i64: 4, 128>}, {pipeline_mode = #tpu.pipeline_mode<synchronous>, transform_indices = @transform_1, window_bounds = array<i64: 32, 4>}, {pipeline_mode = #tpu.pipeline_mode<synchronous>, transform_indices = @transform_2, window_bounds = array<i64: 32, 1>}, {pipeline_mode = #tpu.pipeline_mode<synchronous>, transform_indices = @transform_3, window_bounds = array<i64: 2, 32>}, {pipeline_mode = #tpu.pipeline_mode<synchronous>, transform_indices = @transform_4, window_bounds = array<i64: 2, 1>}, {transform_indices = @transform_5, window_bounds = array<i64: 2, 128>}]} {
    %c0 = arith.constant 0 : index
    %c0_0 = arith.constant 0 : index
    %0 = vector.load %arg2[%c0, %c0_0] : memref<32x4xf32, #tpu.memory_space<vmem>>, vector<32x4xf32>
    %c0_1 = arith.constant 0 : index
    %c0_2 = arith.constant 0 : index
    %1 = vector.load %arg1[%c0_1, %c0_2] : memref<4x128xf32, #tpu.memory_space<vmem>>, vector<4x128xf32>
    %cst = arith.constant dense<0.000000e+00> : vector<32x128xf32>
    %2 = tpu.matmul %0, %1, %cst {dimension_numbers = #tpu.dot_dimension_numbers<[1], [0], [0], [1], [0, 0, 1, 1], [], []>} : vector<32x4xf32>, vector<4x128xf32>, vector<32x128xf32> -> vector<32x128xf32>
    %c0_3 = arith.constant 0 : index
    %c0_4 = arith.constant 0 : index
    %3 = vector.load %arg3[%c0_3, %c0_4] : memref<32x1xf32, #tpu.memory_space<vmem>>, vector<32x1xf32>
    %4 = vector.broadcast %3 : vector<32x1xf32> to vector<32x128xf32>
    %5 = arith.addf %2, %4 : vector<32x128xf32>
    %6 = math.tanh %5 : vector<32x128xf32>
    %c0_5 = arith.constant 0 : index
    %c0_6 = arith.constant 0 : index
    %7 = vector.load %arg4[%c0_5, %c0_6] : memref<2x32xf32, #tpu.memory_space<vmem>>, vector<2x32xf32>
    %cst_7 = arith.constant dense<0.000000e+00> : vector<2x128xf32>
    %8 = tpu.matmul %7, %6, %cst_7 {dimension_numbers = #tpu.dot_dimension_numbers<[1], [0], [0], [1], [0, 0, 1, 1], [], []>} : vector<2x32xf32>, vector<32x128xf32>, vector<2x128xf32> -> vector<2x128xf32>
    %c0_8 = arith.constant 0 : index
    %c0_9 = arith.constant 0 : index
    %9 = vector.load %arg5[%c0_8, %c0_9] : memref<2x1xf32, #tpu.memory_space<vmem>>, vector<2x1xf32>
    %10 = vector.broadcast %9 : vector<2x1xf32> to vector<2x128xf32>
    %11 = arith.addf %8, %10 : vector<2x128xf32>
    %c0_10 = arith.constant 0 : index
    %c0_11 = arith.constant 0 : index
    %12 = vector.load %arg6[%c0_10, %c0_11] : memref<2x128xf32, #tpu.memory_space<vmem>>, vector<2x128xf32>
    tpu.vector_store %arg6[%c0_10, %c0_11], %11 {strides = array<i32>} : memref<2x128xf32, #tpu.memory_space<vmem>>, vector<2x128xf32>,
    return
  }
  func.func @transform_0(%arg0: i32) -> (i32, i32) {
    %c0_i32 = arith.constant 0 : i32
    %c0_i32_0 = arith.constant 0 : i32
    return %c0_i32, %arg0 : i32, i32
  }
  func.func @transform_1(%arg0: i32) -> (i32, i32) {
    %c0_i32 = arith.constant 0 : i32
    %c0_i32_0 = arith.constant 0 : i32
    %c0_i32_1 = arith.constant 0 : i32
    return %c0_i32, %c0_i32_0 : i32, i32
  }
  func.func @transform_2(%arg0: i32) -> (i32, i32) {
    %c0_i32 = arith.constant 0 : i32
    %c0_i32_0 = arith.constant 0 : i32
    %c0_i32_1 = arith.constant 0 : i32
    return %c0_i32, %c0_i32_0 : i32, i32
  }
  func.func @transform_3(%arg0: i32) -> (i32, i32) {
    %c0_i32 = arith.constant 0 : i32
    %c0_i32_0 = arith.constant 0 : i32
    %c0_i32_1 = arith.constant 0 : i32
    return %c0_i32, %c0_i32_0 : i32, i32
  }
  func.func @transform_4(%arg0: i32) -> (i32, i32) {
    %c0_i32 = arith.constant 0 : i32
    %c0_i32_0 = arith.constant 0 : i32
    %c0_i32_1 = arith.constant 0 : i32
    return %c0_i32, %c0_i32_0 : i32, i32
  }
  func.func @transform_5(%arg0: i32) -> (i32, i32) {
    %c0_i32 = arith.constant 0 : i32
    %c0_i32_0 = arith.constant 0 : i32
    return %c0_i32, %arg0 : i32, i32
  }
}

</mosaic_0001>

<llo_original>
// kernel: tpu_custom_call.1
$region0: #{tpu_custom_call.1}
  #allocation0 [shape = 'u32[]', space=smem, size = 0x4, offset = 0x4, fixed_abs, tag = 'smem constant byte address 0x4 - core index']
  #allocation1 [shape = 'u32[144,128]{1,0:T(1,128)}', space=vmem, size = 0x12000, scoped, tag = 'internal scratch']
  %s0 = inlined_call_operand.vmem [shape: f32[4,128], index: 0, kind: input, shape index: {}]
  %s1 = inlined_call_operand.vmem [shape: f32[32,4], index: 1, kind: input, shape index: {}]
  %s2 = inlined_call_operand.vmem [shape: f32[32,1], index: 2, kind: input, shape index: {}]
  %s3 = inlined_call_operand.vmem [shape: f32[2,32], index: 3, kind: input, shape index: {}]
  %s4 = inlined_call_operand.vmem [shape: f32[2,1], index: 4, kind: input, shape index: {}]
  %s5 = inlined_call_operand.hbm [shape: f32[2,128], index: 5, kind: output, shape index: {}]
  %s6 = sld [smem:[#allocation0]]
  $region30: #{tpu_custom_call.1} parent=0
    _
  %s8 = ssub.s32 1, %s6
  %s9 = scalar_select 0, %s8, %s6
  $region1: #{tpu_custom_call.1} parent=0
    #allocation2 [shape = 'u8[1024]{0}', space=vmem, size = 0x400, scoped, tag = 'output window, operand 0, single buffered']
    #allocation3 [shape = 's32[1]{0}', space=sflag, size = 0x4, scoped, tag = 'scoped memory for tpu_custom_call.1']
    %10 = vsyncpa [#allocation3], 0
    // Predicated region
    $region2: #{tpu_custom_call.1} parent=1 // pred_check
      _
    $region3: #{tpu_custom_call.1} parent=1 // pred_check_branch
      %12 = sbr.rel (0) target = $region5
    $region4: #{tpu_custom_call.1} parent=1 // pred_region
      _
    $region5: #{tpu_custom_call.1} parent=1 // pred_fallthru
      _
    // Predicated region
    $region6: #{tpu_custom_call.1} parent=1 // pred_check
      _
    $region7: #{tpu_custom_call.1} parent=1 // pred_check_branch
      %14 = sbr.rel (0) target = $region9
    $region8: #{tpu_custom_call.1} parent=1 // pred_region
      _
    $region9: #{tpu_custom_call.1} parent=1 // pred_fallthru
      _
    // Predicated region
    $region10: #{tpu_custom_call.1} parent=1 // pred_check
      _
    $region11: #{tpu_custom_call.1} parent=1 // pred_check_branch
      %16 = sbr.rel (0) target = $region13
    $region12: #{tpu_custom_call.1} parent=1 // pred_region
      _
    $region13: #{tpu_custom_call.1} parent=1 // pred_fallthru
      _
    // Predicated region
    $region14: #{tpu_custom_call.1} parent=1 // pred_check
      _
    $region15: #{tpu_custom_call.1} parent=1 // pred_check_branch
      %18 = sbr.rel (0) target = $region17
    $region16: #{tpu_custom_call.1} parent=1 // pred_region
      _
    $region17: #{tpu_custom_call.1} parent=1 // pred_fallthru
      _
    // Predicated region
    $region18: #{tpu_custom_call.1} parent=1 // pred_check
      _
    $region19: #{tpu_custom_call.1} parent=1 // pred_check_branch
      %20 = sbr.rel (0) target = $region21
    $region20: #{tpu_custom_call.1} parent=1 // pred_region
      _
    $region21: #{tpu_custom_call.1} parent=1 // pred_fallthru
      _
    %v21 = vld [vmem:[%s1] sm:$0xff]
    %v22 = vld [vmem:[%s1 + $0x8] sm:$0xff]
    %v23 = vld [vmem:[%s1 + $0x10] sm:$0xff]
    %v24 = vld [vmem:[%s1 + $0x18] sm:$0xff]
    %v25 = vld [vmem:[%s0] sm:$0xf]
    %v26 = vld [vmem:[%s2] sm:$0xff]
    %v27 = vld [vmem:[%s2 + $0x8] sm:$0xff]
    %v28 = vld [vmem:[%s2 + $0x10] sm:$0xff]
    %v29 = vld [vmem:[%s2 + $0x18] sm:$0xff]
    %31 = vset.pattern.permute.xlu0 0
    %32 = vperm.xlu0 %31, %v26
    %v33 = vpop.permute.xlu0 %32
    %36 = vset.pattern.permute.xlu0 0
    %37 = vperm.xlu0 %36, %v27
    %v38 = vpop.permute.xlu0 %37
    %41 = vset.pattern.permute.xlu0 0
    %42 = vperm.xlu0 %41, %v28
    %v43 = vpop.permute.xlu0 %42
    %46 = vset.pattern.permute.xlu0 0
    %47 = vperm.xlu0 %46, %v29
    %v48 = vpop.permute.xlu0 %47
    %vm50 = vcmask 31744
    %v52 = vsel %vm50, %v21, 0
    %v55 = vsel %vm50, %v22, 0
    %v58 = vsel %vm50, %v23, 0
    %v61 = vsel %vm50, %v24, 0
    %vm63 = vcmask 1043456
    %v65 = vsel %vm63, %v25, 0
    %67 = vmatprep.subr.mxu0 0.0
    %68 = vmatpush1.msra.mxu0 %v65
    %69 = vmatprep.subr.mxu0 0.0
    %70 = vmatpush1.msra.mxu0 0.0
    %71 = vmatprep.subr.mxu0 0.0
    %72 = vmatpush1.msra.mxu0 0.0
    %73 = vmatprep.subr.mxu0 0.0
    %74 = vmatpush1.msra.mxu0 0.0
    %75 = vmatprep.subr.mxu0 0.0
    %76 = vmatpush1.msra.mxu0 0.0
    %77 = vmatprep.subr.mxu0 0.0
    %78 = vmatpush1.msra.mxu0 0.0
    %79 = vmatprep.subr.mxu0 0.0
    %80 = vmatpush1.msra.mxu0 0.0
    %81 = vmatprep.subr.mxu0 0.0
    %82 = vmatpush1.msra.mxu0 0.0
    %83 = vmatprep.subr.mxu0 0.0
    %84 = vmatpush1.msra.mxu0 0.0
    %85 = vmatprep.subr.mxu0 0.0
    %86 = vmatpush1.msra.mxu0 0.0
    %87 = vmatprep.subr.mxu0 0.0
    %88 = vmatpush1.msra.mxu0 0.0
    %89 = vmatprep.subr.mxu0 0.0
    %90 = vmatpush1.msra.mxu0 0.0
    %91 = vmatprep.subr.mxu0 0.0
    %92 = vmatpush1.msra.mxu0 0.0
    %93 = vmatprep.subr.mxu0 0.0
    %94 = vmatpush1.msra.mxu0 0.0
    %95 = vmatprep.subr.mxu0 0.0
    %96 = vmatpush1.msra.mxu0 0.0
    %97 = vmatprep.subr.mxu0 0.0
    %98 = vmatpush1.msra.mxu0 0.0
    %99 = vmatprep.subr.mxu0 0.0
    %100 = vmatpush1.msra.mxu0 0.0
    %101 = vmatprep.subr.mxu0 0.0
    %102 = vmatpush1.msra.mxu0 0.0
    %103 = vmatprep.subr.mxu0 0.0
    %104 = vmatpush1.msra.mxu0 0.0
    %105 = vmatprep.subr.mxu0 0.0
    %106 = vmatpush1.msra.mxu0 0.0
    %107 = vmatprep.subr.mxu0 0.0
    %108 = vmatpush1.msra.mxu0 0.0
    %109 = vmatprep.subr.mxu0 0.0
    %110 = vmatpush1.msra.mxu0 0.0
    %111 = vmatprep.subr.mxu0 0.0
    %112 = vmatpush1.msra.mxu0 0.0
    %113 = vmatprep.subr.mxu0 0.0
    %114 = vmatpush1.msra.mxu0 0.0
    %115 = vmatprep.subr.mxu0 0.0
    %116 = vmatpush1.msra.mxu0 0.0
    %117 = vmatprep.subr.mxu0 0.0
    %118 = vmatpush1.msra.mxu0 0.0
    %119 = vmatprep.subr.mxu0 0.0
    %120 = vmatpush1.msra.mxu0 0.0
    %121 = vmatprep.subr.mxu0 0.0
    %122 = vmatpush1.msra.mxu0 0.0
    %123 = vmatprep.subr.mxu0 0.0
    %124 = vmatpush1.msra.mxu0 0.0
    %125 = vmatprep.subr.mxu0 0.0
    %126 = vmatpush1.msra.mxu0 0.0
    %127 = vmatprep.subr.mxu0 0.0
    %128 = vmatpush1.msra.mxu0 0.0
    %129 = vmatprep.subr.mxu0 0.0
    %130 = vmatpush1.msra.mxu0 0.0
    %131 = vmatprep.mubr.f32.mxu0 0.0
    %132 = vmatmul.mubr.f32.gmra.mrb[0].mxu0 %v52
    %v133 = vpop.f32.mrb[0].mxu0
    %v134 = vadd.f32 %v33, %v133
    %v135 = vpop.f32.mrb[0].mxu0
    %136 = vmatprep.mubr.f32.mxu0 0.0
    %137 = vmatmul.mubr.f32.gmra.mrb[0].mxu0 %v55
    %v138 = vpop.f32.mrb[0].mxu0
    %v139 = vadd.f32 %v38, %v138
    %v140 = vpop.f32.mrb[0].mxu0
    %141 = vmatprep.mubr.f32.mxu0 0.0
    %142 = vmatmul.mubr.f32.gmra.mrb[0].mxu0 %v58
    %v143 = vpop.f32.mrb[0].mxu0
    %v144 = vadd.f32 %v43, %v143
    %v145 = vpop.f32.mrb[0].mxu0
    %146 = vmatprep.mubr.f32.mxu0 0.0
    %147 = vmatmul.mubr.f32.gmra.mrb[0].mxu0 %v61
    %v148 = vpop.f32.mrb[0].mxu0
    %v149 = vadd.f32 %v48, %v148
    %v150 = vpop.f32.mrb[0].mxu0
    %151 = vdwg.mxu0
    %v152 = vtanh.pop %v134
    %v153 = vtanh.pop %v139
    %v154 = vtanh.pop %v144
    %v155 = vtanh.pop %v149
    %v156 = vld [vmem:[%s3] sm:$0x3]
    %v157 = vld [vmem:[%s4] sm:$0x3]
    %159 = vset.pattern.permute.xlu0 0
    %160 = vperm.xlu0 %159, %v157
    %v161 = vpop.permute.xlu0 %160
    %vm163 = vcmask 261120
    %v165 = vsel %vm163, %v156, 0
    %167 = vmatprep.subr.mxu0 0.0
    %168 = vmatpush1.msra.mxu0 %v152
    %169 = vmatprep.subr.mxu0 0.0
    %170 = vmatpush1.msra.mxu0 %v153
    %171 = vmatprep.subr.mxu0 0.0
    %172 = vmatpush1.msra.mxu0 %v154
    %173 = vmatprep.subr.mxu0 0.0
    %174 = vmatpush1.msra.mxu0 %v155
    %175 = vmatprep.subr.mxu0 0.0
    %176 = vmatpush1.msra.mxu0 0.0
    %177 = vmatprep.subr.mxu0 0.0
    %178 = vmatpush1.msra.mxu0 0.0
    %179 = vmatprep.subr.mxu0 0.0
    %180 = vmatpush1.msra.mxu0 0.0
    %181 = vmatprep.subr.mxu0 0.0
    %182 = vmatpush1.msra.mxu0 0.0
    %183 = vmatprep.subr.mxu0 0.0
    %184 = vmatpush1.msra.mxu0 0.0
    %185 = vmatprep.subr.mxu0 0.0
    %186 = vmatpush1.msra.mxu0 0.0
    %187 = vmatprep.subr.mxu0 0.0
    %188 = vmatpush1.msra.mxu0 0.0
    %189 = vmatprep.subr.mxu0 0.0
    %190 = vmatpush1.msra.mxu0 0.0
    %191 = vmatprep.subr.mxu0 0.0
    %192 = vmatpush1.msra.mxu0 0.0
    %193 = vmatprep.subr.mxu0 0.0
    %194 = vmatpush1.msra.mxu0 0.0
    %195 = vmatprep.subr.mxu0 0.0
    %196 = vmatpush1.msra.mxu0 0.0
    %197 = vmatprep.subr.mxu0 0.0
    %198 = vmatpush1.msra.mxu0 0.0
    %199 = vmatprep.subr.mxu0 0.0
    %200 = vmatpush1.msra.mxu0 0.0
    %201 = vmatprep.subr.mxu0 0.0
    %202 = vmatpush1.msra.mxu0 0.0
    %203 = vmatprep.subr.mxu0 0.0
    %204 = vmatpush1.msra.mxu0 0.0
    %205 = vmatprep.subr.mxu0 0.0
    %206 = vmatpush1.msra.mxu0 0.0
    %207 = vmatprep.subr.mxu0 0.0
    %208 = vmatpush1.msra.mxu0 0.0
    %209 = vmatprep.subr.mxu0 0.0
    %210 = vmatpush1.msra.mxu0 0.0
    %211 = vmatprep.subr.mxu0 0.0
    %212 = vmatpush1.msra.mxu0 0.0
    %213 = vmatprep.subr.mxu0 0.0
    %214 = vmatpush1.msra.mxu0 0.0
    %215 = vmatprep.subr.mxu0 0.0
    %216 = vmatpush1.msra.mxu0 0.0
    %217 = vmatprep.subr.mxu0 0.0
    %218 = vmatpush1.msra.mxu0 0.0
    %219 = vmatprep.subr.mxu0 0.0
    %220 = vmatpush1.msra.mxu0 0.0
    %221 = vmatprep.subr.mxu0 0.0
    %222 = vmatpush1.msra.mxu0 0.0
    %223 = vmatprep.subr.mxu0 0.0
    %224 = vmatpush1.msra.mxu0 0.0
    %225 = vmatprep.subr.mxu0 0.0
    %226 = vmatpush1.msra.mxu0 0.0
    %227 = vmatprep.subr.mxu0 0.0
    %228 = vmatpush1.msra.mxu0 0.0
    %229 = vmatprep.subr.mxu0 0.0
    %230 = vmatpush1.msra.mxu0 0.0
    %231 = vmatprep.mubr.f32.mxu0 0.0
    %232 = vmatmul.mubr.f32.gmra.mrb[0].mxu0 %v165
    %v233 = vpop.f32.mrb[0].mxu0
    %v234 = vadd.f32 %v161, %v233
    %v235 = vpop.f32.mrb[0].mxu0
    %236 = vdwg.mxu0
    %237 = vst [vmem:[#allocation2] sm:$0x3] %v234
    // Predicated region
    $region22: #{tpu_custom_call.1} parent=1 // pred_check
      _
    $region23: #{tpu_custom_call.1} parent=1 // pred_check_branch
      %239 = sbr.rel (0) target = $region25
    $region24: #{tpu_custom_call.1} parent=1 // pred_region
      %s241 = ssub.s32 32, 32
      %242 = vsyncadd [#allocation3], %s241
      %s244 = sshll.u32 [#allocation2], 4
      %s245 = int_to_ptr.vmem [resolvable:$true] %s244
      %247 = dma.vmem_to_hbm [thread:$0]  %s245, 32, %s5, [#allocation3]
    $region25: #{tpu_custom_call.1} parent=1 // pred_fallthru
      _
    // Predicated region
    $region26: #{tpu_custom_call.1} parent=1 // pred_check
      _
    $region27: #{tpu_custom_call.1} parent=1 // pred_check_branch
      %249 = sbr.rel (0) target = $region29
    $region28: #{tpu_custom_call.1} parent=1 // pred_region
      %250 = dma.done [#allocation3], 32
    $region29: #{tpu_custom_call.1} parent=1 // pred_fallthru
      _
    %251 = vsyncpa [#allocation3], 1

</llo_original>
